<compile_context>
chip_gen: v7x
topology: tpu7x:2x2x1
jax: 0.10.0
libtpu: 0.0.40
codegen_flags: <defaults>
</compile_context>

<pallas_src>
import functools

import jax
import jax.numpy as jnp
from jax.experimental import pallas as pl
from jax.experimental.pallas import tpu as pltpu


_LANE = 128      # lane width: last dim of every block padded to a multiple of this
_SUBLANE = 8     # fp32 sublane granularity for the batch (second-to-last) dim


def _round_up(n, m):
    return ((n + m - 1) // m) * m


def _decoder_kernel(x_ref, w_ref, b_ref, o_ref, *, n_layers, compute_dtype):
    """Fused MLP on one batch tile.

    x_ref: (bt, P)      fp32           activation tile (lane-dense, zero padded)
    w_ref: (L, P, P)    compute_dtype  stacked zero-padded weights
    b_ref: (L, 1, P)    fp32           stacked zero-padded biases
    o_ref: (bt, P)      fp32           output tile
    """
    h = x_ref[...].astype(jnp.float32)
    for li in range(n_layers):
        # MXU matmul in bf16 (or chosen compute dtype) with fp32 accumulation.
        y = jnp.dot(h.astype(compute_dtype), w_ref[li],
                    preferred_element_type=jnp.float32)
        y = y + b_ref[li]                     # (1, P) broadcast; fp32 epilogue
        if li != n_layers - 1:
            y = jnp.maximum(y, 0.0)           # ReLU in fp32 (VPU)
        h = y
    o_ref[...] = h.astype(o_ref.dtype)


def init_decoder_params(key, input_dim, no_hidden_layers, width, output_dim,
                        dtype=jnp.float32):
    """PyTorch-style Linear init; weights stored as (in_features, out_features)."""
    dims = [input_dim, width]
    for _ in range(no_hidden_layers - 2):
        dims.append(width)
    dims.append(output_dim)

    params = []
    for i in range(len(dims) - 1):
        key, kw, kb = jax.random.split(key, 3)
        fan_in = dims[i]
        bound = 1.0 / jnp.sqrt(jnp.asarray(fan_in, dtype))
        W = jax.random.uniform(kw, (dims[i], dims[i + 1]), dtype,
                               minval=-bound, maxval=bound)
        bvec = jax.random.uniform(kb, (dims[i + 1],), dtype,
                                  minval=-bound, maxval=bound)
        params.append((W, bvec))
    return params


def pack_decoder_params(params, compute_dtype=jnp.bfloat16):
    """Zero-pad every layer to a common lane-dense width P and stack.

    Zero padding is numerically exact: padded input features are zero, padded
    weight rows/cols and biases are zero, so padded activations remain zero
    through ReLU and never touch the real outputs.
    """
    dims = [params[0][0].shape[0]] + [W.shape[1] for W, _ in params]
    P = _round_up(max(dims), _LANE)
    L = len(params)

    w_stack = jnp.zeros((L, P, P), dtype=compute_dtype)
    b_stack = jnp.zeros((L, 1, P), dtype=jnp.float32)
    for li, (W, b) in enumerate(params):
        d_in, d_out = W.shape
        w_stack = w_stack.at[li, :d_in, :d_out].set(W.astype(compute_dtype))
        b_stack = b_stack.at[li, 0, :d_out].set(b.astype(jnp.float32))

    return {
        "w_stack": w_stack,
        "b_stack": b_stack,
        "input_dim": dims[0],
        "output_dim": dims[-1],
        "padded_dim": P,
        "n_layers": L,
        "compute_dtype": compute_dtype,
    }


def decoder_forward(packed, x, *, batch_tile=128):
    """Fused Pallas forward pass of the whole decoder MLP."""
    B, d_in = x.shape
    assert d_in == packed["input_dim"]
    P = packed["padded_dim"]
    L = packed["n_layers"]

    bt = _round_up(min(batch_tile, _round_up(B, _SUBLANE)), _SUBLANE)
    B_pad = _round_up(B, bt)

    # Pad batch rows and feature lanes once in the wrapper (cheap, outside kernel).
    x_pad = jnp.zeros((B_pad, P), dtype=x.dtype).at[:B, :d_in].set(x)

    grid = (B_pad // bt,)
    kernel = functools.partial(_decoder_kernel, n_layers=L,
                               compute_dtype=packed["compute_dtype"])

    out = pl.pallas_call(
        kernel,
        out_shape=jax.ShapeDtypeStruct((B_pad, P), x.dtype),
        grid_spec=pltpu.PrefetchScalarGridSpec(
            num_scalar_prefetch=0,
            grid=grid,
            in_specs=[
                pl.BlockSpec((bt, P), lambda i: (i, 0)),        # activation tile
                pl.BlockSpec((L, P, P), lambda i: (0, 0, 0)),   # all weights (DMA'd once)
                pl.BlockSpec((L, 1, P), lambda i: (0, 0, 0)),   # all biases  (DMA'd once)
            ],
            out_specs=pl.BlockSpec((bt, P), lambda i: (i, 0)),
        ),
        compiler_params=pltpu.CompilerParams(
            dimension_semantics=("parallel",),   # batch tiles: pipelined + 2-TC on v7x
        ),
    )(x_pad, packed["w_stack"], packed["b_stack"])

    return out[:B, :packed["output_dim"]]


def decoder_reference(params, x, compute_dtype=jnp.bfloat16):
    """Plain-JAX reference using the same (bf16-quantized) weight values."""
    h = x
    n_layers = len(params)
    for li, (W, bvec) in enumerate(params):
        Wq = W.astype(compute_dtype).astype(jnp.float32)
        h = h @ Wq + bvec
        if li != n_layers - 1:
            h = jnp.maximum(h, 0.0)
    return h


if __name__ == "__main__":
    # Shapes consistent with the module's forward: x is (batch, input_dim).
    batch = 256            # batch_tile=128 -> grid=(2,): pipelined, 2-way parallel on v7x
    input_dim = 16
    no_hidden_layers = 3   # -> Linear(16,32)+ReLU, Linear(32,32)+ReLU, Linear(32,24)
    width = 32
    output_dim = 24

    key = jax.random.PRNGKey(0)
    key, kx = jax.random.split(key)
    x = jax.random.normal(kx, (batch, input_dim), dtype=jnp.float32)

    params = init_decoder_params(key, input_dim, no_hidden_layers, width,
                                 output_dim)
    packed = pack_decoder_params(params, compute_dtype=jnp.bfloat16)

    out = decoder_forward(packed, x, batch_tile=128)
    out = jax.block_until_ready(out)

    ref = decoder_reference(params, x, compute_dtype=jnp.bfloat16)

    assert out.shape == (batch, output_dim)
    # bf16 MXU inputs with fp32 accumulation: loosened tolerance vs fp32 path.
    assert jnp.allclose(out, ref, atol=2e-2, rtol=2e-2), float(
        jnp.max(jnp.abs(out - ref)))

    print("KERNEL_OK")
</pallas_src>

<mosaic_0001>
module attributes {stable_mosaic.version = 11 : i64} {
  func.func @_decoder_kernel(%arg0: i32, %arg1: memref<128x128xf32, #tpu.memory_space<vmem>>, %arg2: memref<3x128x128xbf16, #tpu.memory_space<vmem>>, %arg3: memref<3x1x128xf32, #tpu.memory_space<vmem>>, %arg4: memref<128x128xf32, #tpu.memory_space<vmem>>) attributes {dimension_semantics = [#tpu.dimension_semantics<parallel>], iteration_bounds = array<i64: 2>, scalar_prefetch = 0 : i64, scratch_operands = 0 : i64, tpu.core_type = #tpu.core_type<tc>, window_params = [{transform_indices = @transform_0, window_bounds = array<i64: 128, 128>}, {pipeline_mode = #tpu.pipeline_mode<synchronous>, transform_indices = @transform_1, window_bounds = array<i64: 3, 128, 128>}, {pipeline_mode = #tpu.pipeline_mode<synchronous>, transform_indices = @transform_2, window_bounds = array<i64: 3, 1, 128>}, {transform_indices = @transform_3, window_bounds = array<i64: 128, 128>}]} {
    %c0 = arith.constant 0 : index
    %c0_0 = arith.constant 0 : index
    %0 = vector.load %arg1[%c0, %c0_0] : memref<128x128xf32, #tpu.memory_space<vmem>>, vector<128x128xf32>
    %1 = arith.truncf %0 : vector<128x128xf32> to vector<128x128xbf16>
    %c0_1 = arith.constant 0 : index
    %c0_2 = arith.constant 0 : index
    %c0_3 = arith.constant 0 : index
    %2 = vector.load %arg2[%c0_1, %c0_2, %c0_3] : memref<3x128x128xbf16, #tpu.memory_space<vmem>>, vector<1x128x128xbf16>
    %3 = vector.shape_cast %2 : vector<1x128x128xbf16> to vector<128x128xbf16>
    %cst = arith.constant dense<0.000000e+00> : vector<128x128xf32>
    %4 = tpu.matmul %1, %3, %cst {dimension_numbers = #tpu.dot_dimension_numbers<[1], [0], [0], [1], [0, 0, 1, 1], [], []>} : vector<128x128xbf16>, vector<128x128xbf16>, vector<128x128xf32> -> vector<128x128xf32>
    %c0_4 = arith.constant 0 : index
    %c0_5 = arith.constant 0 : index
    %c0_6 = arith.constant 0 : index
    %5 = vector.load %arg3[%c0_4, %c0_5, %c0_6] : memref<3x1x128xf32, #tpu.memory_space<vmem>>, vector<1x1x128xf32>
    %6 = vector.shape_cast %5 : vector<1x1x128xf32> to vector<1x128xf32>
    %7 = vector.broadcast %6 : vector<1x128xf32> to vector<128x128xf32>
    %8 = arith.addf %4, %7 : vector<128x128xf32>
    %cst_7 = arith.constant 0.000000e+00 : f32
    %9 = vector.broadcast %cst_7 : f32 to vector<128x128xf32>
    %10 = arith.maximumf %8, %9 : vector<128x128xf32>
    %11 = arith.truncf %10 : vector<128x128xf32> to vector<128x128xbf16>
    %c1 = arith.constant 1 : index
    %c0_8 = arith.constant 0 : index
    %c0_9 = arith.constant 0 : index
    %12 = vector.load %arg2[%c1, %c0_8, %c0_9] : memref<3x128x128xbf16, #tpu.memory_space<vmem>>, vector<1x128x128xbf16>
    %13 = vector.shape_cast %12 : vector<1x128x128xbf16> to vector<128x128xbf16>
    %cst_10 = arith.constant dense<0.000000e+00> : vector<128x128xf32>
    %14 = tpu.matmul %11, %13, %cst_10 {dimension_numbers = #tpu.dot_dimension_numbers<[1], [0], [0], [1], [0, 0, 1, 1], [], []>} : vector<128x128xbf16>, vector<128x128xbf16>, vector<128x128xf32> -> vector<128x128xf32>
    %c1_11 = arith.constant 1 : index
    %c0_12 = arith.constant 0 : index
    %c0_13 = arith.constant 0 : index
    %15 = vector.load %arg3[%c1_11, %c0_12, %c0_13] : memref<3x1x128xf32, #tpu.memory_space<vmem>>, vector<1x1x128xf32>
    %16 = vector.shape_cast %15 : vector<1x1x128xf32> to vector<1x128xf32>
    %17 = vector.broadcast %16 : vector<1x128xf32> to vector<128x128xf32>
    %18 = arith.addf %14, %17 : vector<128x128xf32>
    %cst_14 = arith.constant 0.000000e+00 : f32
    %19 = vector.broadcast %cst_14 : f32 to vector<128x128xf32>
    %20 = arith.maximumf %18, %19 : vector<128x128xf32>
    %21 = arith.truncf %20 : vector<128x128xf32> to vector<128x128xbf16>
    %c2 = arith.constant 2 : index
    %c0_15 = arith.constant 0 : index
    %c0_16 = arith.constant 0 : index
    %22 = vector.load %arg2[%c2, %c0_15, %c0_16] : memref<3x128x128xbf16, #tpu.memory_space<vmem>>, vector<1x128x128xbf16>
    %23 = vector.shape_cast %22 : vector<1x128x128xbf16> to vector<128x128xbf16>
    %cst_17 = arith.constant dense<0.000000e+00> : vector<128x128xf32>
    %24 = tpu.matmul %21, %23, %cst_17 {dimension_numbers = #tpu.dot_dimension_numbers<[1], [0], [0], [1], [0, 0, 1, 1], [], []>} : vector<128x128xbf16>, vector<128x128xbf16>, vector<128x128xf32> -> vector<128x128xf32>
    %c2_18 = arith.constant 2 : index
    %c0_19 = arith.constant 0 : index
    %c0_20 = arith.constant 0 : index
    %25 = vector.load %arg3[%c2_18, %c0_19, %c0_20] : memref<3x1x128xf32, #tpu.memory_space<vmem>>, vector<1x1x128xf32>
    %26 = vector.shape_cast %25 : vector<1x1x128xf32> to vector<1x128xf32>
    %27 = vector.broadcast %26 : vector<1x128xf32> to vector<128x128xf32>
    %28 = arith.addf %24, %27 : vector<128x128xf32>
    %c0_21 = arith.constant 0 : index
    %c0_22 = arith.constant 0 : index
    %29 = vector.load %arg4[%c0_21, %c0_22] : memref<128x128xf32, #tpu.memory_space<vmem>>, vector<128x128xf32>
    tpu.vector_store %arg4[%c0_21, %c0_22], %28 {strides = array<i32>} : memref<128x128xf32, #tpu.memory_space<vmem>>, vector<128x128xf32>,
    return
  }
  func.func @transform_0(%arg0: i32) -> (i32, i32) {
    %c0_i32 = arith.constant 0 : i32
    %c0_i32_0 = arith.constant 0 : i32
    return %arg0, %c0_i32 : i32, i32
  }
  func.func @transform_1(%arg0: i32) -> (i32, i32, i32) {
    %c0_i32 = arith.constant 0 : i32
    %c0_i32_0 = arith.constant 0 : i32
    %c0_i32_1 = arith.constant 0 : i32
    %c0_i32_2 = arith.constant 0 : i32
    return %c0_i32, %c0_i32_0, %c0_i32_1 : i32, i32, i32
  }
  func.func @transform_2(%arg0: i32) -> (i32, i32, i32) {
    %c0_i32 = arith.constant 0 : i32
    %c0_i32_0 = arith.constant 0 : i32
    %c0_i32_1 = arith.constant 0 : i32
    %c0_i32_2 = arith.constant 0 : i32
    return %c0_i32, %c0_i32_0, %c0_i32_1 : i32, i32, i32
  }
  func.func @transform_3(%arg0: i32) -> (i32, i32) {
    %c0_i32 = arith.constant 0 : i32
    %c0_i32_0 = arith.constant 0 : i32
    return %arg0, %c0_i32 : i32, i32
  }
}

</mosaic_0001>

<llo_original>
// kernel: tpu_custom_call.1
$region0: #{tpu_custom_call.1}
  #allocation0 [shape = 'u32[]', space=smem, size = 0x4, offset = 0x4, fixed_abs, tag = 'smem constant byte address 0x4 - core index']
  #allocation1 [shape = 'u32[144,128]{1,0:T(1,128)}', space=vmem, size = 0x12000, scoped, tag = 'internal scratch']
  %s0 = inlined_call_operand.hbm [shape: f32[256,128], index: 0, kind: input, shape index: {}]
  %s1 = inlined_call_operand.hbm [shape: bf16[3,128,128], index: 1, kind: input, shape index: {}]
  %s2 = inlined_call_operand.vmem [shape: f32[3,1,128], index: 2, kind: input, shape index: {}]
  %s3 = inlined_call_operand.hbm [shape: f32[256,128], index: 3, kind: output, shape index: {}]
  %s4 = sld [smem:[#allocation0]]
  $region53: #{tpu_custom_call.1} parent=0
    _
  %s6 = ssub.s32 1, %s4
  %s7 = scalar_select 0, %s6, %s4
  $region1: #{tpu_custom_call.1} parent=0
    #allocation2 [shape = 'u8[131072]{0}', space=vmem, size = 0x20000, scoped, tag = 'input window, operand 0']
    #allocation3 [shape = 's32[2]{0}', space=sflag, size = 0x8, scoped, tag = 'scoped memory for tpu_custom_call.1']
    #allocation4 [shape = 's32[2]{0}', space=sflag, size = 0x8, scoped, tag = 'scoped memory for tpu_custom_call.1']
    #allocation5 [shape = 'u8[98304]{0}', space=vmem, size = 0x18000, scoped, tag = 'input window, operand 1, single buffered']
    #allocation6 [shape = 's32[1]{0}', space=sflag, size = 0x4, scoped, tag = 'scoped memory for tpu_custom_call.1']
    #allocation7 [shape = 'u8[131072]{0}', space=vmem, size = 0x20000, scoped, tag = 'output window, operand 0']
    %8 = vsyncpa [#allocation3], 0
    %s9 = scalar_lea.sflag [#allocation3], 1
    %10 = vsyncpa %s9, 0
    %11 = vsyncpa [#allocation6], 0
    %12 = vsyncpa [#allocation4], 0
    %s13 = scalar_lea.sflag [#allocation4], 1
    %14 = vsyncpa %s13, 0
    loop: start=0, step=1, limit=4
    $region2: #{tpu_custom_call.1} parent=1 // loop_pre_header
      _
    $region3: #{tpu_custom_call.1} parent=1 // loop_header
      %s16 = sphi 0, %s20
      %p17 = scmp.ge.s32.totalorder %s16, 4
      %s26 = sphi 0, %s28
      %s29 = sphi 0, %s26
      %s30 = sphi 0, %s29
      %s46 = sphi 0, %s30
      %s50 = sphi 0, %s50
      %s52 = sphi 0, %s50
      %s53 = sphi 0, %s52
      %s67 = sphi 0, %s53
      %s71 = sphi 0, %s71
      %s73 = sphi 0, %s71
      %s74 = sphi 0, %s73
      %s88 = sphi 0, %s74
      %s94 = sphi 0, %s96
      %s97 = sphi 0, %s94
      %s98 = sphi 0, %s97
      %s114 = sphi 0, %s98
    $region4: #{tpu_custom_call.1} parent=1 // loop_header_branch
      %19 = sbr.rel (%p17) target = $region8
    $region5: #{tpu_custom_call.1} parent=1 // loop_body
      %s21 = ssub.s32 %s16, 1
      %s22 = ssub.s32 %s16, 2
      %s23 = sadd.s32 %s16, 1
      %s24 = ssub.s32 %s16, %s23
      %p25 = scmp.eq.s32.totalorder %s24, 0
      %s27 = sadd.s32 %s26, 1
      %s28 = scalar_select %p25, %s26, %s27
      %p31 = pneg %p25
      %p32 = scmp.eq.s32.totalorder %s16, 1
      %p33 = por %p31, %p32
      %p34 = scmp.ne.s32.totalorder %s26, %s29
      %p35 = scmp.eq.s32.totalorder %s16, 0
      %p36 = por %p34, %p35
      %p37 = scmp.ne.s32.totalorder %s26, %s29
      %p38 = scmp.eq.s32.totalorder %s21, 1
      %p39 = por %p37, %p38
      %p40 = scmp.ne.s32.totalorder %s29, %s30
      %p41 = scmp.eq.s32.totalorder %s21, 0
      %p42 = por %p40, %p41
      %p43 = scmp.ne.s32.totalorder %s29, %s30
      %p44 = scmp.eq.s32.totalorder %s22, 1
      %p45 = por %p43, %p44
      %p47 = scmp.ne.s32.totalorder %s30, %s46
      %p48 = scmp.eq.s32.totalorder %s22, 0
      %p49 = por %p47, %p48
      %s51 = sadd.s32 %s50, 1
      %p54 = scmp.eq.s32.totalorder %s16, 1
      %p55 = scmp.ne.s32.totalorder %s50, %s52
      %p56 = scmp.eq.s32.totalorder %s16, 0
      %p57 = por %p55, %p56
      %p58 = scmp.ne.s32.totalorder %s50, %s52
      %p59 = scmp.eq.s32.totalorder %s21, 1
      %p60 = por %p58, %p59
      %p61 = scmp.ne.s32.totalorder %s52, %s53
      %p62 = scmp.eq.s32.totalorder %s21, 0
      %p63 = por %p61, %p62
      %p64 = scmp.ne.s32.totalorder %s52, %s53
      %p65 = scmp.eq.s32.totalorder %s22, 1
      %p66 = por %p64, %p65
      %p68 = scmp.ne.s32.totalorder %s53, %s67
      %p69 = scmp.eq.s32.totalorder %s22, 0
      %p70 = por %p68, %p69
      %s72 = sadd.s32 %s71, 1
      %p75 = scmp.eq.s32.totalorder %s16, 1
      %p76 = scmp.ne.s32.totalorder %s71, %s73
      %p77 = scmp.eq.s32.totalorder %s16, 0
      %p78 = por %p76, %p77
      %p79 = scmp.ne.s32.totalorder %s71, %s73
      %p80 = scmp.eq.s32.totalorder %s21, 1
      %p81 = por %p79, %p80
      %p82 = scmp.ne.s32.totalorder %s73, %s74
      %p83 = scmp.eq.s32.totalorder %s21, 0
      %p84 = por %p82, %p83
      %p85 = scmp.ne.s32.totalorder %s73, %s74
      %p86 = scmp.eq.s32.totalorder %s22, 1
      %p87 = por %p85, %p86
      %p89 = scmp.ne.s32.totalorder %s74, %s88
      %p90 = scmp.eq.s32.totalorder %s22, 0
      %p91 = por %p89, %p90
      %s92 = ssub.s32 %s16, %s23
      %p93 = scmp.eq.s32.totalorder %s92, 0
      %s95 = sadd.s32 %s94, 1
      %s96 = scalar_select %p93, %s94, %s95
      %p99 = pneg %p93
      %p100 = scmp.eq.s32.totalorder %s16, 1
      %p101 = por %p99, %p100
      %p102 = scmp.ne.s32.totalorder %s94, %s97
      %p103 = scmp.eq.s32.totalorder %s16, 0
      %p104 = por %p102, %p103
      %p105 = scmp.ne.s32.totalorder %s94, %s97
      %p106 = scmp.eq.s32.totalorder %s21, 1
      %p107 = por %p105, %p106
      %p108 = scmp.ne.s32.totalorder %s97, %s98
      %p109 = scmp.eq.s32.totalorder %s21, 0
      %p110 = por %p108, %p109
      %p111 = scmp.ne.s32.totalorder %s97, %s98
      %p112 = scmp.eq.s32.totalorder %s22, 1
      %p113 = por %p111, %p112
      %p115 = scmp.ne.s32.totalorder %s98, %s114
      %p116 = scmp.eq.s32.totalorder %s22, 0
      %p117 = por %p115, %p116
      %p118 = scmp.le.s32.totalorder 1, %s16
      %p119 = scmp.lt.s32.totalorder %s16, 3
      %p120 = pnand %p118, %p119
      %p121 = pneg %p120
      // Predicated region
      $region9: #{tpu_custom_call.1} parent=5 // pred_check
        _
      $region10: #{tpu_custom_call.1} parent=5 // pred_check_branch
        %123 = sbr.rel (%p120) target = $region12
      $region11: #{tpu_custom_call.1} parent=5 // pred_region
        %s124 = ssub.s32 %s16, 1
        // Predicated region
        $region13: #{tpu_custom_call.1} parent=11 // pred_check
          %p125 = pneg %p63
        $region14: #{tpu_custom_call.1} parent=11 // pred_check_branch
          %127 = sbr.rel (%p125) target = $region16
        $region15: #{tpu_custom_call.1} parent=11 // pred_region
          %s129 = ssub.s32 3072, 3072
          %130 = vsyncadd [#allocation6], %s129
          %s131 = sshll.u32 [#allocation5], 4
          %s132 = int_to_ptr.vmem [resolvable:$true] %s131
          %137 = dma.hbm_to_vmem [thread:$0]  %s1, 3072, %s132, [#allocation6], 64, 64, 4
        $region16: #{tpu_custom_call.1} parent=11 // pred_fallthru
          _
        // Predicated region
        $region17: #{tpu_custom_call.1} parent=11 // pred_check
          %p138 = pneg %p84
        $region18: #{tpu_custom_call.1} parent=11 // pred_check_branch
          %140 = sbr.rel (%p138) target = $region20
        $region19: #{tpu_custom_call.1} parent=11 // pred_region
          _
        $region20: #{tpu_custom_call.1} parent=11 // pred_fallthru
          _
      $region12: #{tpu_custom_call.1} parent=5 // pred_fallthru
        _
      %p141 = scmp.lt.s32.totalorder %s16, 2
      // Predicated region
      $region21: #{tpu_custom_call.1} parent=5 // pred_check
        %p142 = pneg %p141
      $region22: #{tpu_custom_call.1} parent=5 // pred_check_branch
        %144 = sbr.rel (%p142) target = $region24
      $region23: #{tpu_custom_call.1} parent=5 // pred_region
        // Predicated region
        $region25: #{tpu_custom_call.1} parent=23 // pred_check
          %p145 = pneg %p36
        $region26: #{tpu_custom_call.1} parent=23 // pred_check_branch
          %147 = sbr.rel (%p145) target = $region28
        $region27: #{tpu_custom_call.1} parent=23 // pred_region
          %s148 = sand.u32 %s26, 1
          %s149 = scalar_lea.sflag [#allocation3], %s148
          %s150 = sand.u32 %s26, 1
          %s151 = smul.addr %s150, 128
          %s152 = scalar_lea.vmem [#allocation2], %s151
          %s153 = smul.u32 16, %s16
          %s155 = ssub.s32 2048, 2048
          %156 = vsyncadd %s149, %s155
          %s157 = smul.addr %s153, 128
          %s158 = scalar_lea.hbm %s0, %s157
          %s159 = sshll.u32 %s152, 4
          %s160 = int_to_ptr.vmem [resolvable:$true] %s159
          %165 = dma.hbm_to_vmem [thread:$0]  %s158, 2048, %s160, %s149, 128, 128, 8
        $region28: #{tpu_custom_call.1} parent=23 // pred_fallthru
          _
      $region24: #{tpu_custom_call.1} parent=5 // pred_fallthru
        _
      %p166 = scmp.le.s32.totalorder 1, %s16
      %p167 = scmp.lt.s32.totalorder %s16, 3
      %p168 = pnand %p166, %p167
      %p169 = pneg %p168
      // Predicated region
      $region29: #{tpu_custom_call.1} parent=5 // pred_check
        _
      $region30: #{tpu_custom_call.1} parent=5 // pred_check_branch
        %171 = sbr.rel (%p168) target = $region32
      $region31: #{tpu_custom_call.1} parent=5 // pred_region
        %s172 = ssub.s32 %s16, 1
        %s173 = sand.u32 %s29, 1
        %s174 = scalar_lea.sflag [#allocation3], %s173
        %s175 = sand.u32 %s29, 1
        %s176 = smul.addr %s175, 128
        %s177 = scalar_lea.vmem [#allocation2], %s176
        // Predicated region
        $region33: #{tpu_custom_call.1} parent=31 // pred_check
          %p178 = pneg %p42
        $region34: #{tpu_custom_call.1} parent=31 // pred_check_branch
          %180 = sbr.rel (%p178) target = $region36
        $region35: #{tpu_custom_call.1} parent=31 // pred_region
          %181 = dma.done %s174, 2048
        $region36: #{tpu_custom_call.1} parent=31 // pred_fallthru
          _
        // Predicated region
        $region37: #{tpu_custom_call.1} parent=31 // pred_check
          %p182 = pneg %p63
        $region38: #{tpu_custom_call.1} parent=31 // pred_check_branch
          %184 = sbr.rel (%p182) target = $region40
        $region39: #{tpu_custom_call.1} parent=31 // pred_region
          %185 = dma.done [#allocation6], 3072
        $region40: #{tpu_custom_call.1} parent=31 // pred_fallthru
          _
        %s186 = sand.u32 %s29, 1
        %s187 = scalar_lea.sflag [#allocation3], %s186
        %s188 = sand.u32 %s29, 1
        %s189 = smul.addr %s188, 128
        %s190 = scalar_lea.vmem [#allocation2], %s189
        %p191 = pneg %p42
        %p192 = pneg %p39
        %p193 = pneg %p63
        %p194 = pneg %p60
        %p195 = pneg %p84
        %p196 = pneg %p81
        %p197 = pneg %p110
        %p198 = pneg %p107
        %s199 = sand.u32 %s97, 1
        %s200 = scalar_lea.sflag [#allocation4], %s199
        %s201 = sand.u32 %s97, 1
        %s202 = smul.addr %s201, 128
        %s203 = scalar_lea.vmem [#allocation7], %s202
        %s204 = smul.u32 16, %s21
        %s205 = smul.u32 16, %s21
        %v207 = vld [vmem:[%s177] sm:$0xff]
        %v208 = vld [vmem:[%s177 + $0x8] sm:$0xff]
        %v209 = vld [vmem:[%s177 + $0x10] sm:$0xff]
        %v210 = vld [vmem:[%s177 + $0x18] sm:$0xff]
        %v211 = vld [vmem:[%s177 + $0x20] sm:$0xff]
        %v212 = vld [vmem:[%s177 + $0x28] sm:$0xff]
        %v213 = vld [vmem:[%s177 + $0x30] sm:$0xff]
        %v214 = vld [vmem:[%s177 + $0x38] sm:$0xff]
        %v215 = vld [vmem:[%s177 + $0x40] sm:$0xff]
        %v216 = vld [vmem:[%s177 + $0x48] sm:$0xff]
        %v217 = vld [vmem:[%s177 + $0x50] sm:$0xff]
        %v218 = vld [vmem:[%s177 + $0x58] sm:$0xff]
        %v219 = vld [vmem:[%s177 + $0x60] sm:$0xff]
        %v220 = vld [vmem:[%s177 + $0x68] sm:$0xff]
        %v221 = vld [vmem:[%s177 + $0x70] sm:$0xff]
        %v222 = vld [vmem:[%s177 + $0x78] sm:$0xff]
        %v223 = vpack.c.bf16 %v208, %v207
        %v224 = vpack.c.bf16 %v210, %v209
        %v225 = vpack.c.bf16 %v212, %v211
        %v226 = vpack.c.bf16 %v214, %v213
        %v227 = vpack.c.bf16 %v216, %v215
        %v228 = vpack.c.bf16 %v218, %v217
        %v229 = vpack.c.bf16 %v220, %v219
        %v230 = vpack.c.bf16 %v222, %v221
        %v231 = vld [vmem:[#allocation5] sm:$0xf]
        %v232 = vld [vmem:[#allocation5 + $0x4] sm:$0xf]
        %v233 = vld [vmem:[#allocation5 + $0x8] sm:$0xf]
        %v234 = vld [vmem:[#allocation5 + $0xc] sm:$0xf]
        %v235 = vld [vmem:[#allocation5 + $0x10] sm:$0xf]
        %v236 = vld [vmem:[#allocation5 + $0x14] sm:$0xf]
        %v237 = vld [vmem:[#allocation5 + $0x18] sm:$0xf]
        %v238 = vld [vmem:[#allocation5 + $0x1c] sm:$0xf]
        %v239 = vld [vmem:[#allocation5 + $0x20] sm:$0xf]
        %v240 = vld [vmem:[#allocation5 + $0x24] sm:$0xf]
        %v241 = vld [vmem:[#allocation5 + $0x28] sm:$0xf]
        %v242 = vld [vmem:[#allocation5 + $0x2c] sm:$0xf]
        %v243 = vld [vmem:[#allocation5 + $0x30] sm:$0xf]
        %v244 = vld [vmem:[#allocation5 + $0x34] sm:$0xf]
        %v245 = vld [vmem:[#allocation5 + $0x38] sm:$0xf]
        %v246 = vld [vmem:[#allocation5 + $0x3c] sm:$0xf]
        %v247 = vld [vmem:[%s2] sm:$0x1]
        %v249 = vlaneseq
        %v250 = vshrl.u32 %v249, 7
        %v251 = vsub.s32 0, %v250
        %v252 = vrot.slane %v247, %v251
        %v270 = vunpack.c.l.b16 %v231
        %v271 = vunpack.c.l.b16 %v232
        %v272 = vunpack.c.l.b16 %v233
        %v273 = vunpack.c.l.b16 %v234
        %v274 = vunpack.c.l.b16 %v235
        %v275 = vunpack.c.l.b16 %v236
        %v276 = vunpack.c.l.b16 %v237
        %v277 = vunpack.c.l.b16 %v238
        %v278 = vunpack.c.l.b16 %v239
        %v279 = vunpack.c.l.b16 %v240
        %v280 = vunpack.c.l.b16 %v241
        %v281 = vunpack.c.l.b16 %v242
        %v282 = vunpack.c.l.b16 %v243
        %v283 = vunpack.c.l.b16 %v244
        %v284 = vunpack.c.l.b16 %v245
        %v285 = vunpack.c.l.b16 %v246
        %v286 = vpack.c.b16 %v271, %v270
        %v287 = vpack.c.b16 %v273, %v272
        %v288 = vpack.c.b16 %v275, %v274
        %v289 = vpack.c.b16 %v277, %v276
        %v290 = vpack.c.b16 %v279, %v278
        %v291 = vpack.c.b16 %v281, %v280
        %v292 = vpack.c.b16 %v283, %v282
        %v293 = vpack.c.b16 %v285, %v284
        %302 = vmatprep.subr.bf16.mxu0 0
        %303 = vmatpush1.bf16.msra.mxu0 %v286
        %304 = vmatprep.subr.bf16.mxu0 0
        %305 = vmatpush1.bf16.msra.mxu0 %v287
        %306 = vmatprep.subr.bf16.mxu0 0
        %307 = vmatpush1.bf16.msra.mxu0 %v288
        %308 = vmatprep.subr.bf16.mxu0 0
        %309 = vmatpush1.bf16.msra.mxu0 %v289
        %310 = vmatprep.subr.bf16.mxu0 0
        %311 = vmatpush1.bf16.msra.mxu0 %v290
        %312 = vmatprep.subr.bf16.mxu0 0
        %313 = vmatpush1.bf16.msra.mxu0 %v291
        %314 = vmatprep.subr.bf16.mxu0 0
        %315 = vmatpush1.bf16.msra.mxu0 %v292
        %316 = vmatprep.subr.bf16.mxu0 0
        %317 = vmatpush1.bf16.msra.mxu0 %v293
        %318 = vmatprep.subr.bf16.mxu0 0
        %319 = vmatpush1.bf16.msra.mxu0 0
        %320 = vmatprep.subr.bf16.mxu0 0
        %321 = vmatpush1.bf16.msra.mxu0 0
        %322 = vmatprep.subr.bf16.mxu0 0
        %323 = vmatpush1.bf16.msra.mxu0 0
        %324 = vmatprep.subr.bf16.mxu0 0
        %325 = vmatpush1.bf16.msra.mxu0 0
        %326 = vmatprep.subr.bf16.mxu0 0
        %327 = vmatpush1.bf16.msra.mxu0 0
        %328 = vmatprep.subr.bf16.mxu0 0
        %329 = vmatpush1.bf16.msra.mxu0 0
        %330 = vmatprep.subr.bf16.mxu0 0
        %331 = vmatpush1.bf16.msra.mxu0 0
        %332 = vmatprep.subr.bf16.mxu0 0
        %333 = vmatpush1.bf16.msra.mxu0 0
        %334 = vmatprep.mubr.bf16.mxu0 0
        %335 = vmatmul.mubr.bf16.gmra.mrb[0].mxu0 %v223
        %v336 = vpop.f32.mrb[0].mxu0
        %v337 = vadd.f32 %v252, %v336
        %v338 = vpop.f32.mrb[0].mxu0
        %v339 = vpop.f32.mrb[0].mxu0
        %v340 = vadd.f32 %v252, %v339
        %v341 = vpop.f32.mrb[0].mxu0
        %342 = vmatprep.mubr.bf16.mxu0 0
        %343 = vmatmul.mubr.bf16.gmra.mrb[0].mxu0 %v224
        %v344 = vpop.f32.mrb[0].mxu0
        %v345 = vadd.f32 %v252, %v344
        %v346 = vpop.f32.mrb[0].mxu0
        %v347 = vpop.f32.mrb[0].mxu0
        %v348 = vadd.f32 %v252, %v347
        %v349 = vpop.f32.mrb[0].mxu0
        %350 = vmatprep.mubr.bf16.mxu0 0
        %351 = vmatmul.mubr.bf16.gmra.mrb[0].mxu0 %v225
        %v352 = vpop.f32.mrb[0].mxu0
        %v353 = vadd.f32 %v252, %v352
        %v354 = vpop.f32.mrb[0].mxu0
        %v355 = vpop.f32.mrb[0].mxu0
        %v356 = vadd.f32 %v252, %v355
        %v357 = vpop.f32.mrb[0].mxu0
        %358 = vmatprep.mubr.bf16.mxu0 0
        %359 = vmatmul.mubr.bf16.gmra.mrb[0].mxu0 %v226
        %v360 = vpop.f32.mrb[0].mxu0
        %v361 = vadd.f32 %v252, %v360
        %v362 = vpop.f32.mrb[0].mxu0
        %v363 = vpop.f32.mrb[0].mxu0
        %v364 = vadd.f32 %v252, %v363
        %v365 = vpop.f32.mrb[0].mxu0
        %366 = vmatprep.mubr.bf16.mxu0 0
        %367 = vmatmul.mubr.bf16.gmra.mrb[0].mxu0 %v227
        %v368 = vpop.f32.mrb[0].mxu0
        %v369 = vadd.f32 %v252, %v368
        %v370 = vpop.f32.mrb[0].mxu0
        %v371 = vpop.f32.mrb[0].mxu0
        %v372 = vadd.f32 %v252, %v371
        %v373 = vpop.f32.mrb[0].mxu0
        %374 = vmatprep.mubr.bf16.mxu0 0
        %375 = vmatmul.mubr.bf16.gmra.mrb[0].mxu0 %v228
        %v376 = vpop.f32.mrb[0].mxu0
        %v377 = vadd.f32 %v252, %v376
        %v378 = vpop.f32.mrb[0].mxu0
        %v379 = vpop.f32.mrb[0].mxu0
        %v380 = vadd.f32 %v252, %v379
        %v381 = vpop.f32.mrb[0].mxu0
        %382 = vmatprep.mubr.bf16.mxu0 0
        %383 = vmatmul.mubr.bf16.gmra.mrb[0].mxu0 %v229
        %v384 = vpop.f32.mrb[0].mxu0
        %v385 = vadd.f32 %v252, %v384
        %v386 = vpop.f32.mrb[0].mxu0
        %v387 = vpop.f32.mrb[0].mxu0
        %v388 = vadd.f32 %v252, %v387
        %v389 = vpop.f32.mrb[0].mxu0
        %390 = vmatprep.mubr.bf16.mxu0 0
        %391 = vmatmul.mubr.bf16.gmra.mrb[0].mxu0 %v230
        %v392 = vpop.f32.mrb[0].mxu0
        %v393 = vadd.f32 %v252, %v392
        %v394 = vpop.f32.mrb[0].mxu0
        %v395 = vpop.f32.mrb[0].mxu0
        %v396 = vadd.f32 %v252, %v395
        %v397 = vpop.f32.mrb[0].mxu0
        %398 = vdwg.mxu0
        %v399 = vmax.f32 %v337, 0.0
        %v400 = vmax.f32 %v340, 0.0
        %v401 = vmax.f32 %v345, 0.0
        %v402 = vmax.f32 %v348, 0.0
        %v403 = vmax.f32 %v353, 0.0
        %v404 = vmax.f32 %v356, 0.0
        %v405 = vmax.f32 %v361, 0.0
        %v406 = vmax.f32 %v364, 0.0
        %v407 = vmax.f32 %v369, 0.0
        %v408 = vmax.f32 %v372, 0.0
        %v409 = vmax.f32 %v377, 0.0
        %v410 = vmax.f32 %v380, 0.0
        %v411 = vmax.f32 %v385, 0.0
        %v412 = vmax.f32 %v388, 0.0
        %v413 = vmax.f32 %v393, 0.0
        %v414 = vmax.f32 %v396, 0.0
        %v415 = vpack.c.bf16 %v400, %v399
        %v416 = vpack.c.bf16 %v402, %v401
        %v417 = vpack.c.bf16 %v404, %v403
        %v418 = vpack.c.bf16 %v406, %v405
        %v419 = vpack.c.bf16 %v408, %v407
        %v420 = vpack.c.bf16 %v410, %v409
        %v421 = vpack.c.bf16 %v412, %v411
        %v422 = vpack.c.bf16 %v414, %v413
        %s423 = scalar_lea.vmem [#allocation5], 64
        %v424 = vld [vmem:[%s423] sm:$0xf]
        %v425 = vld [vmem:[%s423 + $0x4] sm:$0xf]
        %v426 = vld [vmem:[%s423 + $0x8] sm:$0xf]
        %v427 = vld [vmem:[%s423 + $0xc] sm:$0xf]
        %v428 = vld [vmem:[%s423 + $0x10] sm:$0xf]
        %v429 = vld [vmem:[%s423 + $0x14] sm:$0xf]
        %v430 = vld [vmem:[%s423 + $0x18] sm:$0xf]
        %v431 = vld [vmem:[%s423 + $0x1c] sm:$0xf]
        %v432 = vld [vmem:[%s423 + $0x20] sm:$0xf]
        %v433 = vld [vmem:[%s423 + $0x24] sm:$0xf]
        %v434 = vld [vmem:[%s423 + $0x28] sm:$0xf]
        %v435 = vld [vmem:[%s423 + $0x2c] sm:$0xf]
        %v436 = vld [vmem:[%s423 + $0x30] sm:$0xf]
        %v437 = vld [vmem:[%s423 + $0x34] sm:$0xf]
        %v438 = vld [vmem:[%s423 + $0x38] sm:$0xf]
        %v439 = vld [vmem:[%s423 + $0x3c] sm:$0xf]
        %s440 = scalar_lea.vmem %s2, 1
        %v441 = vld [vmem:[%s440] sm:$0x1]
        %v443 = vlaneseq
        %v444 = vshrl.u32 %v443, 7
        %v445 = vsub.s32 0, %v444
        %v446 = vrot.slane %v441, %v445
        %v464 = vunpack.c.l.b16 %v424
        %v465 = vunpack.c.l.b16 %v425
        %v466 = vunpack.c.l.b16 %v426
        %v467 = vunpack.c.l.b16 %v427
        %v468 = vunpack.c.l.b16 %v428
        %v469 = vunpack.c.l.b16 %v429
        %v470 = vunpack.c.l.b16 %v430
        %v471 = vunpack.c.l.b16 %v431
        %v472 = vunpack.c.l.b16 %v432
        %v473 = vunpack.c.l.b16 %v433
        %v474 = vunpack.c.l.b16 %v434
        %v475 = vunpack.c.l.b16 %v435
        %v476 = vunpack.c.l.b16 %v436
        %v477 = vunpack.c.l.b16 %v437
        %v478 = vunpack.c.l.b16 %v438
        %v479 = vunpack.c.l.b16 %v439
        %v480 = vpack.c.b16 %v465, %v464
        %v481 = vpack.c.b16 %v467, %v466
        %v482 = vpack.c.b16 %v469, %v468
        %v483 = vpack.c.b16 %v471, %v470
        %v484 = vpack.c.b16 %v473, %v472
        %v485 = vpack.c.b16 %v475, %v474
        %v486 = vpack.c.b16 %v477, %v476
        %v487 = vpack.c.b16 %v479, %v478
        %496 = vmatprep.subr.bf16.mxu0 0
        %497 = vmatpush1.bf16.msra.mxu0 %v480
        %498 = vmatprep.subr.bf16.mxu0 0
        %499 = vmatpush1.bf16.msra.mxu0 %v481
        %500 = vmatprep.subr.bf16.mxu0 0
        %501 = vmatpush1.bf16.msra.mxu0 %v482
        %502 = vmatprep.subr.bf16.mxu0 0
        %503 = vmatpush1.bf16.msra.mxu0 %v483
        %504 = vmatprep.subr.bf16.mxu0 0
        %505 = vmatpush1.bf16.msra.mxu0 %v484
        %506 = vmatprep.subr.bf16.mxu0 0
        %507 = vmatpush1.bf16.msra.mxu0 %v485
        %508 = vmatprep.subr.bf16.mxu0 0
        %509 = vmatpush1.bf16.msra.mxu0 %v486
        %510 = vmatprep.subr.bf16.mxu0 0
        %511 = vmatpush1.bf16.msra.mxu0 %v487
        %512 = vmatprep.subr.bf16.mxu0 0
        %513 = vmatpush1.bf16.msra.mxu0 0
        %514 = vmatprep.subr.bf16.mxu0 0
        %515 = vmatpush1.bf16.msra.mxu0 0
        %516 = vmatprep.subr.bf16.mxu0 0
        %517 = vmatpush1.bf16.msra.mxu0 0
        %518 = vmatprep.subr.bf16.mxu0 0
        %519 = vmatpush1.bf16.msra.mxu0 0
        %520 = vmatprep.subr.bf16.mxu0 0
        %521 = vmatpush1.bf16.msra.mxu0 0
        %522 = vmatprep.subr.bf16.mxu0 0
        %523 = vmatpush1.bf16.msra.mxu0 0
        %524 = vmatprep.subr.bf16.mxu0 0
        %525 = vmatpush1.bf16.msra.mxu0 0
        %526 = vmatprep.subr.bf16.mxu0 0
        %527 = vmatpush1.bf16.msra.mxu0 0
        %528 = vmatprep.mubr.bf16.mxu0 0
        %529 = vmatmul.mubr.bf16.gmra.mrb[0].mxu0 %v415
        %v530 = vpop.f32.mrb[0].mxu0
        %v531 = vadd.f32 %v446, %v530
        %v532 = vpop.f32.mrb[0].mxu0
        %v533 = vpop.f32.mrb[0].mxu0
        %v534 = vadd.f32 %v446, %v533
        %v535 = vpop.f32.mrb[0].mxu0
        %536 = vmatprep.mubr.bf16.mxu0 0
        %537 = vmatmul.mubr.bf16.gmra.mrb[0].mxu0 %v416
        %v538 = vpop.f32.mrb[0].mxu0
        %v539 = vadd.f32 %v446, %v538
        %v540 = vpop.f32.mrb[0].mxu0
        %v541 = vpop.f32.mrb[0].mxu0
        %v542 = vadd.f32 %v446, %v541
        %v543 = vpop.f32.mrb[0].mxu0
        %544 = vmatprep.mubr.bf16.mxu0 0
        %545 = vmatmul.mubr.bf16.gmra.mrb[0].mxu0 %v417
        %v546 = vpop.f32.mrb[0].mxu0
        %v547 = vadd.f32 %v446, %v546
        %v548 = vpop.f32.mrb[0].mxu0
        %v549 = vpop.f32.mrb[0].mxu0
        %v550 = vadd.f32 %v446, %v549
        %v551 = vpop.f32.mrb[0].mxu0
        %552 = vmatprep.mubr.bf16.mxu0 0
        %553 = vmatmul.mubr.bf16.gmra.mrb[0].mxu0 %v418
        %v554 = vpop.f32.mrb[0].mxu0
        %v555 = vadd.f32 %v446, %v554
        %v556 = vpop.f32.mrb[0].mxu0
        %v557 = vpop.f32.mrb[0].mxu0
        %v558 = vadd.f32 %v446, %v557
        %v559 = vpop.f32.mrb[0].mxu0
        %560 = vmatprep.mubr.bf16.mxu0 0
        %561 = vmatmul.mubr.bf16.gmra.mrb[0].mxu0 %v419
        %v562 = vpop.f32.mrb[0].mxu0
        %v563 = vadd.f32 %v446, %v562
        %v564 = vpop.f32.mrb[0].mxu0
        %v565 = vpop.f32.mrb[0].mxu0
        %v566 = vadd.f32 %v446, %v565
        %v567 = vpop.f32.mrb[0].mxu0
        %568 = vmatprep.mubr.bf16.mxu0 0
        %569 = vmatmul.mubr.bf16.gmra.mrb[0].mxu0 %v420
        %v570 = vpop.f32.mrb[0].mxu0
        %v571 = vadd.f32 %v446, %v570
        %v572 = vpop.f32.mrb[0].mxu0
        %v573 = vpop.f32.mrb[0].mxu0
        %v574 = vadd.f32 %v446, %v573
        %v575 = vpop.f32.mrb[0].mxu0
        %576 = vmatprep.mubr.bf16.mxu0 0
        %577 = vmatmul.mubr.bf16.gmra.mrb[0].mxu0 %v421
        %v578 = vpop.f32.mrb[0].mxu0
        %v579 = vadd.f32 %v446, %v578
        %v580 = vpop.f32.mrb[0].mxu0
        %v581 = vpop.f32.mrb[0].mxu0
        %v582 = vadd.f32 %v446, %v581
        %v583 = vpop.f32.mrb[0].mxu0
        %584 = vmatprep.mubr.bf16.mxu0 0
        %585 = vmatmul.mubr.bf16.gmra.mrb[0].mxu0 %v422
        %v586 = vpop.f32.mrb[0].mxu0
        %v587 = vadd.f32 %v446, %v586
        %v588 = vpop.f32.mrb[0].mxu0
        %v589 = vpop.f32.mrb[0].mxu0
        %v590 = vadd.f32 %v446, %v589
        %v591 = vpop.f32.mrb[0].mxu0
        %592 = vdwg.mxu0
        %v593 = vmax.f32 %v531, 0.0
        %v594 = vmax.f32 %v534, 0.0
        %v595 = vmax.f32 %v539, 0.0
        %v596 = vmax.f32 %v542, 0.0
        %v597 = vmax.f32 %v547, 0.0
        %v598 = vmax.f32 %v550, 0.0
        %v599 = vmax.f32 %v555, 0.0
        %v600 = vmax.f32 %v558, 0.0
        %v601 = vmax.f32 %v563, 0.0
        %v602 = vmax.f32 %v566, 0.0
        %v603 = vmax.f32 %v571, 0.0
        %v604 = vmax.f32 %v574, 0.0
        %v605 = vmax.f32 %v579, 0.0
        %v606 = vmax.f32 %v582, 0.0
        %v607 = vmax.f32 %v587, 0.0
        %v608 = vmax.f32 %v590, 0.0
        %v609 = vpack.c.bf16 %v594, %v593
        %v610 = vpack.c.bf16 %v596, %v595
        %v611 = vpack.c.bf16 %v598, %v597
        %v612 = vpack.c.bf16 %v600, %v599
        %v613 = vpack.c.bf16 %v602, %v601
        %v614 = vpack.c.bf16 %v604, %v603
        %v615 = vpack.c.bf16 %v606, %v605
        %v616 = vpack.c.bf16 %v608, %v607
        %s617 = scalar_lea.vmem [#allocation5], 128
        %v618 = vld [vmem:[%s617] sm:$0xf]
        %v619 = vld [vmem:[%s617 + $0x4] sm:$0xf]
        %v620 = vld [vmem:[%s617 + $0x8] sm:$0xf]
        %v621 = vld [vmem:[%s617 + $0xc] sm:$0xf]
        %v622 = vld [vmem:[%s617 + $0x10] sm:$0xf]
        %v623 = vld [vmem:[%s617 + $0x14] sm:$0xf]
        %v624 = vld [vmem:[%s617 + $0x18] sm:$0xf]
        %v625 = vld [vmem:[%s617 + $0x1c] sm:$0xf]
        %v626 = vld [vmem:[%s617 + $0x20] sm:$0xf]
        %v627 = vld [vmem:[%s617 + $0x24] sm:$0xf]
        %v628 = vld [vmem:[%s617 + $0x28] sm:$0xf]
        %v629 = vld [vmem:[%s617 + $0x2c] sm:$0xf]
        %v630 = vld [vmem:[%s617 + $0x30] sm:$0xf]
        %v631 = vld [vmem:[%s617 + $0x34] sm:$0xf]
        %v632 = vld [vmem:[%s617 + $0x38] sm:$0xf]
        %v633 = vld [vmem:[%s617 + $0x3c] sm:$0xf]
        %s634 = scalar_lea.vmem %s2, 2
        %v635 = vld [vmem:[%s634] sm:$0x1]
        %v637 = vlaneseq
        %v638 = vshrl.u32 %v637, 7
        %v639 = vsub.s32 0, %v638
        %v640 = vrot.slane %v635, %v639
        %v658 = vunpack.c.l.b16 %v618
        %v659 = vunpack.c.l.b16 %v619
        %v660 = vunpack.c.l.b16 %v620
        %v661 = vunpack.c.l.b16 %v621
        %v662 = vunpack.c.l.b16 %v622
        %v663 = vunpack.c.l.b16 %v623
        %v664 = vunpack.c.l.b16 %v624
        %v665 = vunpack.c.l.b16 %v625
        %v666 = vunpack.c.l.b16 %v626
        %v667 = vunpack.c.l.b16 %v627
        %v668 = vunpack.c.l.b16 %v628
        %v669 = vunpack.c.l.b16 %v629
        %v670 = vunpack.c.l.b16 %v630
        %v671 = vunpack.c.l.b16 %v631
        %v672 = vunpack.c.l.b16 %v632
        %v673 = vunpack.c.l.b16 %v633
        %v674 = vpack.c.b16 %v659, %v658
        %v675 = vpack.c.b16 %v661, %v660
        %v676 = vpack.c.b16 %v663, %v662
        %v677 = vpack.c.b16 %v665, %v664
        %v678 = vpack.c.b16 %v667, %v666
        %v679 = vpack.c.b16 %v669, %v668
        %v680 = vpack.c.b16 %v671, %v670
        %v681 = vpack.c.b16 %v673, %v672
        %690 = vmatprep.subr.bf16.mxu0 0
        %691 = vmatpush1.bf16.msra.mxu0 %v674
        %692 = vmatprep.subr.bf16.mxu0 0
        %693 = vmatpush1.bf16.msra.mxu0 %v675
        %694 = vmatprep.subr.bf16.mxu0 0
        %695 = vmatpush1.bf16.msra.mxu0 %v676
        %696 = vmatprep.subr.bf16.mxu0 0
        %697 = vmatpush1.bf16.msra.mxu0 %v677
        %698 = vmatprep.subr.bf16.mxu0 0
        %699 = vmatpush1.bf16.msra.mxu0 %v678
        %700 = vmatprep.subr.bf16.mxu0 0
        %701 = vmatpush1.bf16.msra.mxu0 %v679
        %702 = vmatprep.subr.bf16.mxu0 0
        %703 = vmatpush1.bf16.msra.mxu0 %v680
        %704 = vmatprep.subr.bf16.mxu0 0
        %705 = vmatpush1.bf16.msra.mxu0 %v681
        %706 = vmatprep.subr.bf16.mxu0 0
        %707 = vmatpush1.bf16.msra.mxu0 0
        %708 = vmatprep.subr.bf16.mxu0 0
        %709 = vmatpush1.bf16.msra.mxu0 0
        %710 = vmatprep.subr.bf16.mxu0 0
        %711 = vmatpush1.bf16.msra.mxu0 0
        %712 = vmatprep.subr.bf16.mxu0 0
        %713 = vmatpush1.bf16.msra.mxu0 0
        %714 = vmatprep.subr.bf16.mxu0 0
        %715 = vmatpush1.bf16.msra.mxu0 0
        %716 = vmatprep.subr.bf16.mxu0 0
        %717 = vmatpush1.bf16.msra.mxu0 0
        %718 = vmatprep.subr.bf16.mxu0 0
        %719 = vmatpush1.bf16.msra.mxu0 0
        %720 = vmatprep.subr.bf16.mxu0 0
        %721 = vmatpush1.bf16.msra.mxu0 0
        %722 = vmatprep.mubr.bf16.mxu0 0
        %723 = vmatmul.mubr.bf16.gmra.mrb[0].mxu0 %v609
        %v724 = vpop.f32.mrb[0].mxu0
        %v725 = vadd.f32 %v640, %v724
        %v726 = vpop.f32.mrb[0].mxu0
        %v727 = vpop.f32.mrb[0].mxu0
        %v728 = vadd.f32 %v640, %v727
        %v729 = vpop.f32.mrb[0].mxu0
        %730 = vmatprep.mubr.bf16.mxu0 0
        %731 = vmatmul.mubr.bf16.gmra.mrb[0].mxu0 %v610
        %v732 = vpop.f32.mrb[0].mxu0
        %v733 = vadd.f32 %v640, %v732
        %v734 = vpop.f32.mrb[0].mxu0
        %v735 = vpop.f32.mrb[0].mxu0
        %v736 = vadd.f32 %v640, %v735
        %v737 = vpop.f32.mrb[0].mxu0
        %738 = vmatprep.mubr.bf16.mxu0 0
        %739 = vmatmul.mubr.bf16.gmra.mrb[0].mxu0 %v611
        %v740 = vpop.f32.mrb[0].mxu0
        %v741 = vadd.f32 %v640, %v740
        %v742 = vpop.f32.mrb[0].mxu0
        %v743 = vpop.f32.mrb[0].mxu0
        %v744 = vadd.f32 %v640, %v743
        %v745 = vpop.f32.mrb[0].mxu0
        %746 = vmatprep.mubr.bf16.mxu0 0
        %747 = vmatmul.mubr.bf16.gmra.mrb[0].mxu0 %v612
        %v748 = vpop.f32.mrb[0].mxu0
        %v749 = vadd.f32 %v640, %v748
        %v750 = vpop.f32.mrb[0].mxu0
        %v751 = vpop.f32.mrb[0].mxu0
        %v752 = vadd.f32 %v640, %v751
        %v753 = vpop.f32.mrb[0].mxu0
        %754 = vmatprep.mubr.bf16.mxu0 0
        %755 = vmatmul.mubr.bf16.gmra.mrb[0].mxu0 %v613
        %v756 = vpop.f32.mrb[0].mxu0
        %v757 = vadd.f32 %v640, %v756
        %v758 = vpop.f32.mrb[0].mxu0
        %v759 = vpop.f32.mrb[0].mxu0
        %v760 = vadd.f32 %v640, %v759
        %v761 = vpop.f32.mrb[0].mxu0
        %762 = vmatprep.mubr.bf16.mxu0 0
        %763 = vmatmul.mubr.bf16.gmra.mrb[0].mxu0 %v614
        %v764 = vpop.f32.mrb[0].mxu0
        %v765 = vadd.f32 %v640, %v764
        %v766 = vpop.f32.mrb[0].mxu0
        %v767 = vpop.f32.mrb[0].mxu0
        %v768 = vadd.f32 %v640, %v767
        %v769 = vpop.f32.mrb[0].mxu0
        %770 = vmatprep.mubr.bf16.mxu0 0
        %771 = vmatmul.mubr.bf16.gmra.mrb[0].mxu0 %v615
        %v772 = vpop.f32.mrb[0].mxu0
        %v773 = vadd.f32 %v640, %v772
        %v774 = vpop.f32.mrb[0].mxu0
        %v775 = vpop.f32.mrb[0].mxu0
        %v776 = vadd.f32 %v640, %v775
        %v777 = vpop.f32.mrb[0].mxu0
        %778 = vmatprep.mubr.bf16.mxu0 0
        %779 = vmatmul.mubr.bf16.gmra.mrb[0].mxu0 %v616
        %v780 = vpop.f32.mrb[0].mxu0
        %v781 = vadd.f32 %v640, %v780
        %v782 = vpop.f32.mrb[0].mxu0
        %v783 = vpop.f32.mrb[0].mxu0
        %v784 = vadd.f32 %v640, %v783
        %v785 = vpop.f32.mrb[0].mxu0
        %786 = vdwg.mxu0
        %787 = vst [vmem:[%s203] sm:$0xff] %v725
        %788 = vst [vmem:[%s203 + $0x8] sm:$0xff] %v728
        %789 = vst [vmem:[%s203 + $0x10] sm:$0xff] %v733
        %790 = vst [vmem:[%s203 + $0x18] sm:$0xff] %v736
        %791 = vst [vmem:[%s203 + $0x20] sm:$0xff] %v741
        %792 = vst [vmem:[%s203 + $0x28] sm:$0xff] %v744
        %793 = vst [vmem:[%s203 + $0x30] sm:$0xff] %v749
        %794 = vst [vmem:[%s203 + $0x38] sm:$0xff] %v752
        %795 = vst [vmem:[%s203 + $0x40] sm:$0xff] %v757
        %796 = vst [vmem:[%s203 + $0x48] sm:$0xff] %v760
        %797 = vst [vmem:[%s203 + $0x50] sm:$0xff] %v765
        %798 = vst [vmem:[%s203 + $0x58] sm:$0xff] %v768
        %799 = vst [vmem:[%s203 + $0x60] sm:$0xff] %v773
        %800 = vst [vmem:[%s203 + $0x68] sm:$0xff] %v776
        %801 = vst [vmem:[%s203 + $0x70] sm:$0xff] %v781
        %802 = vst [vmem:[%s203 + $0x78] sm:$0xff] %v784
        %s803 = sand.u32 %s97, 1
        %s804 = scalar_lea.sflag [#allocation4], %s803
        %s805 = sand.u32 %s97, 1
        %s806 = smul.addr %s805, 128
        %s807 = scalar_lea.vmem [#allocation7], %s806
        // Predicated region
        $region41: #{tpu_custom_call.1} parent=31 // pred_check
          %p808 = pneg %p107
        $region42: #{tpu_custom_call.1} parent=31 // pred_check_branch
          %810 = sbr.rel (%p808) target = $region44
        $region43: #{tpu_custom_call.1} parent=31 // pred_region
          %s811 = smul.u32 16, %s21
          %s813 = ssub.s32 2048, 2048
          %814 = vsyncadd %s804, %s813
          %s815 = smul.addr %s811, 128
          %s816 = scalar_lea.hbm %s3, %s815
          %s817 = sshll.u32 %s807, 4
          %s818 = int_to_ptr.vmem [resolvable:$true] %s817
          %823 = dma.vmem_to_hbm [thread:$0]  %s818, 2048, %s816, %s804, 128, 128, 8
        $region44: #{tpu_custom_call.1} parent=31 // pred_fallthru
          _
      $region32: #{tpu_custom_call.1} parent=5 // pred_fallthru
        _
      %p824 = scmp.le.s32.totalorder 2, %s16
      // Predicated region
      $region45: #{tpu_custom_call.1} parent=5 // pred_check
        %p825 = pneg %p824
      $region46: #{tpu_custom_call.1} parent=5 // pred_check_branch
        %827 = sbr.rel (%p825) target = $region48
      $region47: #{tpu_custom_call.1} parent=5 // pred_region
        %s828 = ssub.s32 %s16, 2
        // Predicated region
        $region49: #{tpu_custom_call.1} parent=47 // pred_check
          %p829 = pneg %p113
        $region50: #{tpu_custom_call.1} parent=47 // pred_check_branch
          %831 = sbr.rel (%p829) target = $region52
        $region51: #{tpu_custom_call.1} parent=47 // pred_region
          %s832 = sand.u32 %s98, 1
          %s833 = scalar_lea.sflag [#allocation4], %s832
          %s834 = sand.u32 %s98, 1
          %s835 = smul.addr %s834, 128
          %s836 = scalar_lea.vmem [#allocation7], %s835
          %837 = dma.done %s833, 2048
        $region52: #{tpu_custom_call.1} parent=47 // pred_fallthru
          _
      $region48: #{tpu_custom_call.1} parent=5 // pred_fallthru
        _
    $region6: #{tpu_custom_call.1} parent=1 // loop_footer
      %s20 = sadd.s32 1, %s16
    $region7: #{tpu_custom_call.1} parent=1 // loop_footer_branch
      %15 = sbr.rel target = $region3
    $region8: #{tpu_custom_call.1} parent=1 // loop_exit
      _
    %838 = vsyncpa [#allocation3], 1
    %s839 = scalar_lea.sflag [#allocation3], 1
    %840 = vsyncpa %s839, 1
    %841 = vsyncpa [#allocation6], 1
    %842 = vsyncpa [#allocation4], 1
    %s843 = scalar_lea.sflag [#allocation4], 1
    %844 = vsyncpa %s843, 1

</llo_original>
